<compile_context>
chip_gen: v6e
topology: v6e:2x2x1
jax: 0.10.0
libtpu: 0.0.40
codegen_flags: <defaults>
</compile_context>

<pallas_src>
import jax
import jax.numpy as jnp
from jax.experimental import pallas as pl
from jax.experimental.pallas import tpu as pltpu


def _round_up(x, m):
    return ((x + m - 1) // m) * m


def vae_kernel(x_ref, eps_ref,
               w_enc_ref, b_enc_ref,
               w_mulv_ref, b_mulv_ref,
               w_dec_ref, b_dec_ref,
               mu_ref, lv_ref, code_ref, rec_ref):
    c = mu_ref.shape[-1]                                   # padded code size (multiple of 128)

    x = x_ref[...]                                         # [TB, Din_p] bf16

    # autoencoder.encode(inputs)['code'] -> single Linear (bf16 MXU, f32 acc)
    enc = jnp.dot(x, w_enc_ref[...],
                  preferred_element_type=jnp.float32) + b_enc_ref[...]     # [TB, C_p] f32

    # fused mu_layer || log_var_layer -> one matmul, split with static slices
    mulv = jnp.dot(enc.astype(jnp.bfloat16), w_mulv_ref[...],
                   preferred_element_type=jnp.float32) + b_mulv_ref[...]   # [TB, 2*C_p] f32
    mu = mulv[:, :c]
    lv = mulv[:, c:]

    # re_parametrize: std = exp(log_var / 2); code = eps * std + mu   (all f32)
    std = jnp.exp(lv * 0.5)
    code = eps_ref[...] * std + mu                                         # [TB, C_p] f32

    # autoencoder.decode(code) -> single Linear + sigmoid
    rec = jnp.dot(code.astype(jnp.bfloat16), w_dec_ref[...],
                  preferred_element_type=jnp.float32) + b_dec_ref[...]     # [TB, Din_p] f32
    rec = jax.nn.sigmoid(rec)

    mu_ref[...] = mu
    lv_ref[...] = lv
    code_ref[...] = code
    rec_ref[...] = rec


def vae_forward(x, eps, params, *, batch_tile=256):
    B, Din = x.shape
    C = params["w_mu"].shape[1]

    f32, bf16 = jnp.float32, jnp.bfloat16

    # Lane-dense padded feature dims (multiples of 128).
    Din_p = _round_up(Din, 128)
    C_p = _round_up(C, 128)

    # Batch tile: >=256 rows when the batch allows it (fills MXU M-dim on
    # v6e/v7x); for tiny batches, one tile of 16-multiple rows (bf16 sublane).
    TB = batch_tile if B >= batch_tile else _round_up(max(B, 16), 16)
    B_p = _round_up(B, TB)

    def pad2(a, rows, cols, dtype):
        out = jnp.zeros((rows, cols), dtype)
        return out.at[:a.shape[0], :a.shape[1]].set(a.astype(dtype))

    # Zero-padded inputs / weights (zeros contribute exactly 0 to the matmuls,
    # so the valid region is unchanged; padded rows/cols are sliced off below).
    x_p = pad2(x, B_p, Din_p, bf16)
    eps_p = pad2(eps, B_p, C_p, f32)

    w_enc = pad2(params["w_enc"], Din_p, C_p, bf16)
    b_enc = pad2(params["b_enc"], 1, C_p, f32)

    # Fused mu || log_var head: [C_p, 2*C_p] weight, [1, 2*C_p] bias.
    w_mulv = jnp.zeros((C_p, 2 * C_p), bf16)
    w_mulv = w_mulv.at[:C, :C].set(params["w_mu"].astype(bf16))
    w_mulv = w_mulv.at[:C, C_p:C_p + C].set(params["w_lv"].astype(bf16))
    b_mulv = jnp.zeros((1, 2 * C_p), f32)
    b_mulv = b_mulv.at[:, :C].set(params["b_mu"][0].astype(f32))
    b_mulv = b_mulv.at[:, C_p:C_p + C].set(params["b_lv"][0].astype(f32))

    w_dec = pad2(params["w_dec"], C_p, Din_p, bf16)
    b_dec = pad2(params["b_dec"], 1, Din_p, f32)

    grid = (B_p // TB,)

    def batch_spec(cols):
        return pl.BlockSpec((TB, cols), lambda i: (i, 0))

    def resident_spec(shape):
        # Constant block index -> weight stays VMEM-resident across grid steps.
        return pl.BlockSpec(shape, lambda i: (0, 0))

    flops = 2 * B_p * (Din_p * C_p + C_p * (2 * C_p) + C_p * Din_p)
    transcendentals = B_p * (C_p + Din_p)              # exp + sigmoid
    bytes_accessed = (
        x_p.size * 2 + eps_p.size * 4
        + (w_enc.size + w_mulv.size + w_dec.size) * 2
        + (b_enc.size + b_mulv.size + b_dec.size) * 4
        + B_p * (3 * C_p + Din_p) * 4                  # mu, lv, code, rec
    )

    mu, lv, code, rec = pl.pallas_call(
        vae_kernel,
        out_shape=(
            jax.ShapeDtypeStruct((B_p, C_p), f32),     # mu
            jax.ShapeDtypeStruct((B_p, C_p), f32),     # log_var
            jax.ShapeDtypeStruct((B_p, C_p), f32),     # code
            jax.ShapeDtypeStruct((B_p, Din_p), f32),   # reconstructed
        ),
        grid=grid,
        in_specs=[
            batch_spec(Din_p),                         # x
            batch_spec(C_p),                           # eps
            resident_spec((Din_p, C_p)),               # w_enc
            resident_spec((1, C_p)),                   # b_enc
            resident_spec((C_p, 2 * C_p)),             # w_mulv (fused)
            resident_spec((1, 2 * C_p)),               # b_mulv (fused)
            resident_spec((C_p, Din_p)),               # w_dec
            resident_spec((1, Din_p)),                 # b_dec
        ],
        out_specs=(
            batch_spec(C_p),
            batch_spec(C_p),
            batch_spec(C_p),
            batch_spec(Din_p),
        ),
        compiler_params=pltpu.CompilerParams(
            dimension_semantics=("parallel",)),
        cost_estimate=pl.CostEstimate(
            flops=flops,
            transcendentals=transcendentals,
            bytes_accessed=bytes_accessed),
    )(x_p, eps_p, w_enc, b_enc, w_mulv, b_mulv, w_dec, b_dec)

    return {
        "mu": mu[:B, :C],
        "log_var": lv[:B, :C],
        "code": code[:B, :C],
        "reconstructed": rec[:B, :Din],
    }


def init_params(key, input_size, code_size):
    """Deterministic PyTorch-Linear-style init (uniform +/- 1/sqrt(fan_in))."""
    def linear(k, fan_in, fan_out):
        k_w, k_b = jax.random.split(k)
        bound = 1.0 / jnp.sqrt(fan_in)
        w = jax.random.uniform(k_w, (fan_in, fan_out), jnp.float32, -bound, bound)
        b = jax.random.uniform(k_b, (1, fan_out), jnp.float32, -bound, bound)
        return w, b

    k_enc, k_mu, k_lv, k_dec = jax.random.split(key, 4)
    w_enc, b_enc = linear(k_enc, input_size, code_size)
    w_mu, b_mu = linear(k_mu, code_size, code_size)
    w_lv, b_lv = linear(k_lv, code_size, code_size)
    w_dec, b_dec = linear(k_dec, code_size, input_size)
    return dict(w_enc=w_enc, b_enc=b_enc, w_mu=w_mu, b_mu=b_mu,
                w_lv=w_lv, b_lv=b_lv, w_dec=w_dec, b_dec=b_dec)


def vae_forward_ref(x, eps, p):
    """Pure-JAX reference with the same bf16-operand / f32-accumulate matmuls."""
    bf16 = jnp.bfloat16

    def mm(a, w):
        return jnp.dot(a.astype(bf16), w.astype(bf16),
                       preferred_element_type=jnp.float32)

    enc = mm(x, p["w_enc"]) + p["b_enc"]
    mu = mm(enc, p["w_mu"]) + p["b_mu"]
    lv = mm(enc, p["w_lv"]) + p["b_lv"]
    code = eps * jnp.exp(lv * 0.5) + mu
    rec = jax.nn.sigmoid(mm(code, p["w_dec"]) + p["b_dec"])
    return {"mu": mu, "log_var": lv, "code": code, "reconstructed": rec}


if __name__ == "__main__":
    B, INPUT_SIZE, CODE_SIZE = 8, 64, 32

    key = jax.random.PRNGKey(0)
    k_x, k_eps, k_params = jax.random.split(key, 3)

    x = jax.random.normal(k_x, (B, INPUT_SIZE), jnp.float32)
    eps = jax.random.normal(k_eps, (B, CODE_SIZE), jnp.float32)  # torch.randn_like(std)
    params = init_params(k_params, INPUT_SIZE, CODE_SIZE)

    out = vae_forward(x, eps, params)
    jax.block_until_ready(out)

    ref = vae_forward_ref(x, eps, params)
    for name in ("mu", "log_var", "code", "reconstructed"):
        assert out[name].shape == ref[name].shape, name
        assert jnp.allclose(out[name], ref[name], atol=1e-2, rtol=1e-2), name

    print("KERNEL_OK")
</pallas_src>

<mosaic_0001>
module attributes {stable_mosaic.version = 11 : i64} {
  func.func @vae_kernel(%arg0: i32, %arg1: memref<16x128xbf16, #tpu.memory_space<vmem>>, %arg2: memref<16x128xf32, #tpu.memory_space<vmem>>, %arg3: memref<128x128xbf16, #tpu.memory_space<vmem>>, %arg4: memref<1x128xf32, #tpu.memory_space<vmem>>, %arg5: memref<128x256xbf16, #tpu.memory_space<vmem>>, %arg6: memref<1x256xf32, #tpu.memory_space<vmem>>, %arg7: memref<128x128xbf16, #tpu.memory_space<vmem>>, %arg8: memref<1x128xf32, #tpu.memory_space<vmem>>, %arg9: memref<16x128xf32, #tpu.memory_space<vmem>>, %arg10: memref<16x128xf32, #tpu.memory_space<vmem>>, %arg11: memref<16x128xf32, #tpu.memory_space<vmem>>, %arg12: memref<16x128xf32, #tpu.memory_space<vmem>>) attributes {dimension_semantics = [#tpu.dimension_semantics<parallel>], iteration_bounds = array<i64: 1>, scalar_prefetch = 0 : i64, scratch_operands = 0 : i64, tpu.core_type = #tpu.core_type<tc>, window_params = [{transform_indices = @transform_0, window_bounds = array<i64: 16, 128>}, {transform_indices = @transform_1, window_bounds = array<i64: 16, 128>}, {pipeline_mode = #tpu.pipeline_mode<synchronous>, transform_indices = @transform_2, window_bounds = array<i64: 128, 128>}, {pipeline_mode = #tpu.pipeline_mode<synchronous>, transform_indices = @transform_3, window_bounds = array<i64: 1, 128>}, {pipeline_mode = #tpu.pipeline_mode<synchronous>, transform_indices = @transform_4, window_bounds = array<i64: 128, 256>}, {pipeline_mode = #tpu.pipeline_mode<synchronous>, transform_indices = @transform_5, window_bounds = array<i64: 1, 256>}, {pipeline_mode = #tpu.pipeline_mode<synchronous>, transform_indices = @transform_6, window_bounds = array<i64: 128, 128>}, {pipeline_mode = #tpu.pipeline_mode<synchronous>, transform_indices = @transform_7, window_bounds = array<i64: 1, 128>}, {transform_indices = @transform_8, window_bounds = array<i64: 16, 128>}, {transform_indices = @transform_9, window_bounds = array<i64: 16, 128>}, {transform_indices = @transform_10, window_bounds = array<i64: 16, 128>}, {transform_indices = @transform_11, window_bounds = array<i64: 16, 128>}]} {
    %c0 = arith.constant 0 : index
    %c0_0 = arith.constant 0 : index
    %0 = vector.load %arg1[%c0, %c0_0] : memref<16x128xbf16, #tpu.memory_space<vmem>>, vector<16x128xbf16>
    %c0_1 = arith.constant 0 : index
    %c0_2 = arith.constant 0 : index
    %1 = vector.load %arg3[%c0_1, %c0_2] : memref<128x128xbf16, #tpu.memory_space<vmem>>, vector<128x128xbf16>
    %cst = arith.constant dense<0.000000e+00> : vector<16x128xf32>
    %2 = tpu.matmul %0, %1, %cst {dimension_numbers = #tpu.dot_dimension_numbers<[1], [0], [0], [1], [0, 0, 1, 1], [], []>} : vector<16x128xbf16>, vector<128x128xbf16>, vector<16x128xf32> -> vector<16x128xf32>
    %c0_3 = arith.constant 0 : index
    %c0_4 = arith.constant 0 : index
    %3 = vector.load %arg4[%c0_3, %c0_4] : memref<1x128xf32, #tpu.memory_space<vmem>>, vector<1x128xf32>
    %4 = vector.broadcast %3 : vector<1x128xf32> to vector<16x128xf32>
    %5 = arith.addf %2, %4 : vector<16x128xf32>
    %6 = arith.truncf %5 : vector<16x128xf32> to vector<16x128xbf16>
    %c0_5 = arith.constant 0 : index
    %c0_6 = arith.constant 0 : index
    %7 = vector.load %arg5[%c0_5, %c0_6] : memref<128x256xbf16, #tpu.memory_space<vmem>>, vector<128x256xbf16>
    %cst_7 = arith.constant dense<0.000000e+00> : vector<16x256xf32>
    %8 = tpu.matmul %6, %7, %cst_7 {dimension_numbers = #tpu.dot_dimension_numbers<[1], [0], [0], [1], [0, 0, 1, 1], [], []>} : vector<16x128xbf16>, vector<128x256xbf16>, vector<16x256xf32> -> vector<16x256xf32>
    %c0_8 = arith.constant 0 : index
    %c0_9 = arith.constant 0 : index
    %9 = vector.load %arg6[%c0_8, %c0_9] : memref<1x256xf32, #tpu.memory_space<vmem>>, vector<1x256xf32>
    %10 = vector.broadcast %9 : vector<1x256xf32> to vector<16x256xf32>
    %11 = arith.addf %8, %10 : vector<16x256xf32>
    %12 = vector.extract_strided_slice %11 {offsets = [0, 0], sizes = [16, 128], strides = [1, 1]} : vector<16x256xf32> to vector<16x128xf32>
    %13 = vector.extract_strided_slice %11 {offsets = [0, 128], sizes = [16, 128], strides = [1, 1]} : vector<16x256xf32> to vector<16x128xf32>
    %cst_10 = arith.constant 5.000000e-01 : f32
    %14 = vector.broadcast %cst_10 : f32 to vector<16x128xf32>
    %15 = arith.mulf %13, %14 : vector<16x128xf32>
    %16 = math.exp %15 : vector<16x128xf32>
    %c0_11 = arith.constant 0 : index
    %c0_12 = arith.constant 0 : index
    %17 = vector.load %arg2[%c0_11, %c0_12] : memref<16x128xf32, #tpu.memory_space<vmem>>, vector<16x128xf32>
    %18 = arith.mulf %17, %16 : vector<16x128xf32>
    %19 = arith.addf %18, %12 : vector<16x128xf32>
    %20 = arith.truncf %19 : vector<16x128xf32> to vector<16x128xbf16>
    %c0_13 = arith.constant 0 : index
    %c0_14 = arith.constant 0 : index
    %21 = vector.load %arg7[%c0_13, %c0_14] : memref<128x128xbf16, #tpu.memory_space<vmem>>, vector<128x128xbf16>
    %cst_15 = arith.constant dense<0.000000e+00> : vector<16x128xf32>
    %22 = tpu.matmul %20, %21, %cst_15 {dimension_numbers = #tpu.dot_dimension_numbers<[1], [0], [0], [1], [0, 0, 1, 1], [], []>} : vector<16x128xbf16>, vector<128x128xbf16>, vector<16x128xf32> -> vector<16x128xf32>
    %c0_16 = arith.constant 0 : index
    %c0_17 = arith.constant 0 : index
    %23 = vector.load %arg8[%c0_16, %c0_17] : memref<1x128xf32, #tpu.memory_space<vmem>>, vector<1x128xf32>
    %24 = vector.broadcast %23 : vector<1x128xf32> to vector<16x128xf32>
    %25 = arith.addf %22, %24 : vector<16x128xf32>
    %26 = arith.negf %25 : vector<16x128xf32>
    %27 = math.exp %26 : vector<16x128xf32>
    %cst_18 = arith.constant 1.000000e+00 : f32
    %28 = vector.broadcast %cst_18 : f32 to vector<16x128xf32>
    %29 = arith.addf %28, %27 : vector<16x128xf32>
    %30 = arith.divf %28, %29 : vector<16x128xf32>
    %c0_19 = arith.constant 0 : index
    %c0_20 = arith.constant 0 : index
    %31 = vector.load %arg9[%c0_19, %c0_20] : memref<16x128xf32, #tpu.memory_space<vmem>>, vector<16x128xf32>
    tpu.vector_store %arg9[%c0_19, %c0_20], %12 {strides = array<i32>} : memref<16x128xf32, #tpu.memory_space<vmem>>, vector<16x128xf32>,
    %c0_21 = arith.constant 0 : index
    %c0_22 = arith.constant 0 : index
    %32 = vector.load %arg10[%c0_21, %c0_22] : memref<16x128xf32, #tpu.memory_space<vmem>>, vector<16x128xf32>
    tpu.vector_store %arg10[%c0_21, %c0_22], %13 {strides = array<i32>} : memref<16x128xf32, #tpu.memory_space<vmem>>, vector<16x128xf32>,
    %c0_23 = arith.constant 0 : index
    %c0_24 = arith.constant 0 : index
    %33 = vector.load %arg11[%c0_23, %c0_24] : memref<16x128xf32, #tpu.memory_space<vmem>>, vector<16x128xf32>
    tpu.vector_store %arg11[%c0_23, %c0_24], %19 {strides = array<i32>} : memref<16x128xf32, #tpu.memory_space<vmem>>, vector<16x128xf32>,
    %c0_25 = arith.constant 0 : index
    %c0_26 = arith.constant 0 : index
    %34 = vector.load %arg12[%c0_25, %c0_26] : memref<16x128xf32, #tpu.memory_space<vmem>>, vector<16x128xf32>
    tpu.vector_store %arg12[%c0_25, %c0_26], %30 {strides = array<i32>} : memref<16x128xf32, #tpu.memory_space<vmem>>, vector<16x128xf32>,
    return
  }
  func.func @transform_0(%arg0: i32) -> (i32, i32) {
    %c0_i32 = arith.constant 0 : i32
    %c0_i32_0 = arith.constant 0 : i32
    return %arg0, %c0_i32 : i32, i32
  }
  func.func @transform_1(%arg0: i32) -> (i32, i32) {
    %c0_i32 = arith.constant 0 : i32
    %c0_i32_0 = arith.constant 0 : i32
    return %arg0, %c0_i32 : i32, i32
  }
  func.func @transform_2(%arg0: i32) -> (i32, i32) {
    %c0_i32 = arith.constant 0 : i32
    %c0_i32_0 = arith.constant 0 : i32
    %c0_i32_1 = arith.constant 0 : i32
    return %c0_i32, %c0_i32_0 : i32, i32
  }
  func.func @transform_3(%arg0: i32) -> (i32, i32) {
    %c0_i32 = arith.constant 0 : i32
    %c0_i32_0 = arith.constant 0 : i32
    %c0_i32_1 = arith.constant 0 : i32
    return %c0_i32, %c0_i32_0 : i32, i32
  }
  func.func @transform_4(%arg0: i32) -> (i32, i32) {
    %c0_i32 = arith.constant 0 : i32
    %c0_i32_0 = arith.constant 0 : i32
    %c0_i32_1 = arith.constant 0 : i32
    return %c0_i32, %c0_i32_0 : i32, i32
  }
  func.func @transform_5(%arg0: i32) -> (i32, i32) {
    %c0_i32 = arith.constant 0 : i32
    %c0_i32_0 = arith.constant 0 : i32
    %c0_i32_1 = arith.constant 0 : i32
    return %c0_i32, %c0_i32_0 : i32, i32
  }
  func.func @transform_6(%arg0: i32) -> (i32, i32) {
    %c0_i32 = arith.constant 0 : i32
    %c0_i32_0 = arith.constant 0 : i32
    %c0_i32_1 = arith.constant 0 : i32
    return %c0_i32, %c0_i32_0 : i32, i32
  }
  func.func @transform_7(%arg0: i32) -> (i32, i32) {
    %c0_i32 = arith.constant 0 : i32
    %c0_i32_0 = arith.constant 0 : i32
    %c0_i32_1 = arith.constant 0 : i32
    return %c0_i32, %c0_i32_0 : i32, i32
  }
  func.func @transform_8(%arg0: i32) -> (i32, i32) {
    %c0_i32 = arith.constant 0 : i32
    %c0_i32_0 = arith.constant 0 : i32
    return %arg0, %c0_i32 : i32, i32
  }
  func.func @transform_9(%arg0: i32) -> (i32, i32) {
    %c0_i32 = arith.constant 0 : i32
    %c0_i32_0 = arith.constant 0 : i32
    return %arg0, %c0_i32 : i32, i32
  }
  func.func @transform_10(%arg0: i32) -> (i32, i32) {
    %c0_i32 = arith.constant 0 : i32
    %c0_i32_0 = arith.constant 0 : i32
    return %arg0, %c0_i32 : i32, i32
  }
  func.func @transform_11(%arg0: i32) -> (i32, i32) {
    %c0_i32 = arith.constant 0 : i32
    %c0_i32_0 = arith.constant 0 : i32
    return %arg0, %c0_i32 : i32, i32
  }
}

</mosaic_0001>

<llo_original>
// kernel: tpu_custom_call.1
$region0: #{tpu_custom_call.1}
  #allocation0 [shape = 'u32[]', space=smem, size = 0x4, offset = 0x4, fixed_abs, tag = 'smem constant byte address 0x4 - core index']
  #allocation1 [shape = 'u32[144,128]{1,0:T(1,128)}', space=vmem, size = 0x12000, scoped, tag = 'internal scratch']
  %s0 = inlined_call_operand.hbm [shape: bf16[16,128], index: 0, kind: input, shape index: {}]
  %s1 = inlined_call_operand.hbm [shape: f32[16,128], index: 1, kind: input, shape index: {}]
  %s2 = inlined_call_operand.hbm [shape: bf16[128,128], index: 2, kind: input, shape index: {}]
  %s3 = inlined_call_operand.vmem [shape: f32[1,128], index: 3, kind: input, shape index: {}]
  %s4 = inlined_call_operand.hbm [shape: bf16[128,256], index: 4, kind: input, shape index: {}]
  %s5 = inlined_call_operand.vmem [shape: f32[1,256], index: 5, kind: input, shape index: {}]
  %s6 = inlined_call_operand.hbm [shape: bf16[128,128], index: 6, kind: input, shape index: {}]
  %s7 = inlined_call_operand.vmem [shape: f32[1,128], index: 7, kind: input, shape index: {}]
  %s8 = inlined_call_operand.hbm [shape: f32[16,128], index: 8, kind: output, shape index: {0}]
  %s9 = inlined_call_operand.hbm [shape: f32[16,128], index: 9, kind: output, shape index: {1}]
  %s10 = inlined_call_operand.hbm [shape: f32[16,128], index: 10, kind: output, shape index: {2}]
  %s11 = inlined_call_operand.hbm [shape: f32[16,128], index: 11, kind: output, shape index: {3}]
  %12 = xla_tuple %s8, %s9, %s10, %s11
  %s13 = sld [smem:[#allocation0]]
  $region86: #{tpu_custom_call.1} parent=0
    _
  %s15 = ssub.s32 1, %s13
  %s16 = scalar_select 0, %s15, %s13
  $region1: #{tpu_custom_call.1} parent=0
    #allocation2 [shape = 'u8[4096]{0}', space=vmem, size = 0x1000, scoped, tag = 'input window, operand 0, single buffered']
    #allocation3 [shape = 's32[1]{0}', space=sflag, size = 0x4, scoped, tag = 'scoped memory for tpu_custom_call.1']
    #allocation4 [shape = 's32[1]{0}', space=sflag, size = 0x4, scoped, tag = 'scoped memory for tpu_custom_call.1']
    #allocation5 [shape = 'u8[8192]{0}', space=vmem, size = 0x2000, scoped, tag = 'input window, operand 1, single buffered']
    #allocation6 [shape = 's32[1]{0}', space=sflag, size = 0x4, scoped, tag = 'scoped memory for tpu_custom_call.1']
    #allocation7 [shape = 'u8[32768]{0}', space=vmem, size = 0x8000, scoped, tag = 'input window, operand 2, single buffered']
    #allocation8 [shape = 'u8[65536]{0}', space=vmem, size = 0x10000, scoped, tag = 'input window, operand 4, single buffered']
    #allocation9 [shape = 's32[1]{0}', space=sflag, size = 0x4, scoped, tag = 'scoped memory for tpu_custom_call.1']
    #allocation10 [shape = 'u8[32768]{0}', space=vmem, size = 0x8000, scoped, tag = 'input window, operand 6, single buffered']
    #allocation11 [shape = 'u8[8192]{0}', space=vmem, size = 0x2000, scoped, tag = 'output window, operand 0, single buffered']
    #allocation12 [shape = 'u8[8192]{0}', space=vmem, size = 0x2000, scoped, tag = 'output window, operand 1, single buffered']
    #allocation13 [shape = 's32[1]{0}', space=sflag, size = 0x4, scoped, tag = 'scoped memory for tpu_custom_call.1']
    #allocation14 [shape = 'u8[8192]{0}', space=vmem, size = 0x2000, scoped, tag = 'output window, operand 2, single buffered']
    #allocation15 [shape = 'u8[8192]{0}', space=vmem, size = 0x2000, scoped, tag = 'output window, operand 3, single buffered']
    #allocation16 [shape = 's32[1]{0}', space=sflag, size = 0x4, scoped, tag = 'scoped memory for tpu_custom_call.1']
    %17 = vsyncpa [#allocation3], 0
    %18 = vsyncpa [#allocation6], 0
    %19 = vsyncpa [#allocation9], 0
    %20 = vsyncpa [#allocation4], 0
    %21 = vsyncpa [#allocation13], 0
    %22 = vsyncpa [#allocation16], 0
    // Predicated region
    $region2: #{tpu_custom_call.1} parent=1 // pred_check
      _
    $region3: #{tpu_custom_call.1} parent=1 // pred_check_branch
      %24 = sbr.rel (0) target = $region5
    $region4: #{tpu_custom_call.1} parent=1 // pred_region
      %s26 = ssub.s32 128, 128
      %27 = vsyncadd [#allocation3], %s26
      %s28 = sshll.u32 [#allocation2], 4
      %s29 = int_to_ptr.vmem [resolvable:$true] %s28
      %34 = dma.hbm_to_vmem [thread:$0]  %s0, 128, %s29, [#allocation3], 64, 64, 4
    $region5: #{tpu_custom_call.1} parent=1 // pred_fallthru
      _
    // Predicated region
    $region6: #{tpu_custom_call.1} parent=1 // pred_check
      _
    $region7: #{tpu_custom_call.1} parent=1 // pred_check_branch
      %36 = sbr.rel (0) target = $region9
    $region8: #{tpu_custom_call.1} parent=1 // pred_region
      %s38 = ssub.s32 256, 256
      %39 = vsyncadd [#allocation6], %s38
      %s40 = sshll.u32 [#allocation5], 4
      %s41 = int_to_ptr.vmem [resolvable:$true] %s40
      %46 = dma.hbm_to_vmem [thread:$0]  %s1, 256, %s41, [#allocation6], 128, 128, 8
    $region9: #{tpu_custom_call.1} parent=1 // pred_fallthru
      _
    // Predicated region
    $region10: #{tpu_custom_call.1} parent=1 // pred_check
      _
    $region11: #{tpu_custom_call.1} parent=1 // pred_check_branch
      %48 = sbr.rel (0) target = $region13
    $region12: #{tpu_custom_call.1} parent=1 // pred_region
      %s50 = ssub.s32 1024, 1024
      %51 = vsyncadd [#allocation6], %s50
      %s52 = sshll.u32 [#allocation7], 4
      %s53 = int_to_ptr.vmem [resolvable:$true] %s52
      %58 = dma.hbm_to_vmem [thread:$0]  %s2, 1024, %s53, [#allocation6], 64, 64, 4
    $region13: #{tpu_custom_call.1} parent=1 // pred_fallthru
      _
    // Predicated region
    $region14: #{tpu_custom_call.1} parent=1 // pred_check
      _
    $region15: #{tpu_custom_call.1} parent=1 // pred_check_branch
      %60 = sbr.rel (0) target = $region17
    $region16: #{tpu_custom_call.1} parent=1 // pred_region
      _
    $region17: #{tpu_custom_call.1} parent=1 // pred_fallthru
      _
    // Predicated region
    $region18: #{tpu_custom_call.1} parent=1 // pred_check
      _
    $region19: #{tpu_custom_call.1} parent=1 // pred_check_branch
      %62 = sbr.rel (0) target = $region21
    $region20: #{tpu_custom_call.1} parent=1 // pred_region
      %s64 = ssub.s32 2048, 2048
      %65 = vsyncadd [#allocation9], %s64
      %s66 = sshll.u32 [#allocation8], 4
      %s67 = int_to_ptr.vmem [resolvable:$true] %s66
      %72 = dma.hbm_to_vmem [thread:$0]  %s4, 2048, %s67, [#allocation9], 128, 128, 8
    $region21: #{tpu_custom_call.1} parent=1 // pred_fallthru
      _
    // Predicated region
    $region22: #{tpu_custom_call.1} parent=1 // pred_check
      _
    $region23: #{tpu_custom_call.1} parent=1 // pred_check_branch
      %74 = sbr.rel (0) target = $region25
    $region24: #{tpu_custom_call.1} parent=1 // pred_region
      _
    $region25: #{tpu_custom_call.1} parent=1 // pred_fallthru
      _
    // Predicated region
    $region26: #{tpu_custom_call.1} parent=1 // pred_check
      _
    $region27: #{tpu_custom_call.1} parent=1 // pred_check_branch
      %76 = sbr.rel (0) target = $region29
    $region28: #{tpu_custom_call.1} parent=1 // pred_region
      %s78 = ssub.s32 1024, 1024
      %79 = vsyncadd [#allocation9], %s78
      %s80 = sshll.u32 [#allocation10], 4
      %s81 = int_to_ptr.vmem [resolvable:$true] %s80
      %86 = dma.hbm_to_vmem [thread:$0]  %s6, 1024, %s81, [#allocation9], 64, 64, 4
    $region29: #{tpu_custom_call.1} parent=1 // pred_fallthru
      _
    // Predicated region
    $region30: #{tpu_custom_call.1} parent=1 // pred_check
      _
    $region31: #{tpu_custom_call.1} parent=1 // pred_check_branch
      %88 = sbr.rel (0) target = $region33
    $region32: #{tpu_custom_call.1} parent=1 // pred_region
      _
    $region33: #{tpu_custom_call.1} parent=1 // pred_fallthru
      _
    // Predicated region
    $region34: #{tpu_custom_call.1} parent=1 // pred_check
      _
    $region35: #{tpu_custom_call.1} parent=1 // pred_check_branch
      %90 = sbr.rel (0) target = $region37
    $region36: #{tpu_custom_call.1} parent=1 // pred_region
      %91 = dma.done [#allocation3], 128
    $region37: #{tpu_custom_call.1} parent=1 // pred_fallthru
      _
    // Predicated region
    $region38: #{tpu_custom_call.1} parent=1 // pred_check
      _
    $region39: #{tpu_custom_call.1} parent=1 // pred_check_branch
      %93 = sbr.rel (0) target = $region41
    $region40: #{tpu_custom_call.1} parent=1 // pred_region
      %94 = dma.done [#allocation6], 256
    $region41: #{tpu_custom_call.1} parent=1 // pred_fallthru
      _
    // Predicated region
    $region42: #{tpu_custom_call.1} parent=1 // pred_check
      _
    $region43: #{tpu_custom_call.1} parent=1 // pred_check_branch
      %96 = sbr.rel (0) target = $region45
    $region44: #{tpu_custom_call.1} parent=1 // pred_region
      %97 = dma.done [#allocation6], 1024
    $region45: #{tpu_custom_call.1} parent=1 // pred_fallthru
      _
    // Predicated region
    $region46: #{tpu_custom_call.1} parent=1 // pred_check
      _
    $region47: #{tpu_custom_call.1} parent=1 // pred_check_branch
      %99 = sbr.rel (0) target = $region49
    $region48: #{tpu_custom_call.1} parent=1 // pred_region
      %100 = dma.done [#allocation9], 2048
    $region49: #{tpu_custom_call.1} parent=1 // pred_fallthru
      _
    // Predicated region
    $region50: #{tpu_custom_call.1} parent=1 // pred_check
      _
    $region51: #{tpu_custom_call.1} parent=1 // pred_check_branch
      %102 = sbr.rel (0) target = $region53
    $region52: #{tpu_custom_call.1} parent=1 // pred_region
      %103 = dma.done [#allocation9], 1024
    $region53: #{tpu_custom_call.1} parent=1 // pred_fallthru
      _
    %v105 = vld [vmem:[#allocation2] sm:$0xf]
    %v106 = vld [vmem:[#allocation2 + $0x4] sm:$0xf]
    %v107 = vld [vmem:[#allocation7] sm:$0xf]
    %v108 = vld [vmem:[#allocation7 + $0x4] sm:$0xf]
    %v109 = vld [vmem:[#allocation7 + $0x8] sm:$0xf]
    %v110 = vld [vmem:[#allocation7 + $0xc] sm:$0xf]
    %v111 = vld [vmem:[#allocation7 + $0x10] sm:$0xf]
    %v112 = vld [vmem:[#allocation7 + $0x14] sm:$0xf]
    %v113 = vld [vmem:[#allocation7 + $0x18] sm:$0xf]
    %v114 = vld [vmem:[#allocation7 + $0x1c] sm:$0xf]
    %v115 = vld [vmem:[#allocation7 + $0x20] sm:$0xf]
    %v116 = vld [vmem:[#allocation7 + $0x24] sm:$0xf]
    %v117 = vld [vmem:[#allocation7 + $0x28] sm:$0xf]
    %v118 = vld [vmem:[#allocation7 + $0x2c] sm:$0xf]
    %v119 = vld [vmem:[#allocation7 + $0x30] sm:$0xf]
    %v120 = vld [vmem:[#allocation7 + $0x34] sm:$0xf]
    %v121 = vld [vmem:[#allocation7 + $0x38] sm:$0xf]
    %v122 = vld [vmem:[#allocation7 + $0x3c] sm:$0xf]
    %v123 = vld [vmem:[%s3] sm:$0x1]
    %v125 = vlaneseq
    %v126 = vshrl.u32 %v125, 7
    %v127 = vsub.s32 0, %v126
    %v128 = vrot.slane %v123, %v127
    %v132 = vunpack.c.l.b16 %v105
    %v133 = vunpack.c.l.b16 %v106
    %v134 = vpack.c.b16 %v133, %v132
    %v152 = vunpack.c.l.b16 %v107
    %v153 = vunpack.c.l.b16 %v108
    %v154 = vunpack.c.l.b16 %v109
    %v155 = vunpack.c.l.b16 %v110
    %v156 = vunpack.c.l.b16 %v111
    %v157 = vunpack.c.l.b16 %v112
    %v158 = vunpack.c.l.b16 %v113
    %v159 = vunpack.c.l.b16 %v114
    %v160 = vunpack.c.l.b16 %v115
    %v161 = vunpack.c.l.b16 %v116
    %v162 = vunpack.c.l.b16 %v117
    %v163 = vunpack.c.l.b16 %v118
    %v164 = vunpack.c.l.b16 %v119
    %v165 = vunpack.c.l.b16 %v120
    %v166 = vunpack.c.l.b16 %v121
    %v167 = vunpack.c.l.b16 %v122
    %v168 = vpack.c.b16 %v153, %v152
    %v169 = vpack.c.b16 %v155, %v154
    %v170 = vpack.c.b16 %v157, %v156
    %v171 = vpack.c.b16 %v159, %v158
    %v172 = vpack.c.b16 %v161, %v160
    %v173 = vpack.c.b16 %v163, %v162
    %v174 = vpack.c.b16 %v165, %v164
    %v175 = vpack.c.b16 %v167, %v166
    %184 = vmatprep.subr.bf16.mxu0 0
    %185 = vmatpush1.bf16.msra.mxu0 %v175
    %186 = vmatprep.subr.bf16.mxu0 0
    %187 = vmatpush1.bf16.msra.mxu0 %v174
    %188 = vmatprep.subr.bf16.mxu0 0
    %189 = vmatpush1.bf16.msra.mxu0 %v173
    %190 = vmatprep.subr.bf16.mxu0 0
    %191 = vmatpush1.bf16.msra.mxu0 %v172
    %192 = vmatprep.subr.bf16.mxu0 0
    %193 = vmatpush1.bf16.msra.mxu0 %v171
    %194 = vmatprep.subr.bf16.mxu0 0
    %195 = vmatpush1.bf16.msra.mxu0 %v170
    %196 = vmatprep.subr.bf16.mxu0 0
    %197 = vmatpush1.bf16.msra.mxu0 %v169
    %198 = vmatprep.subr.bf16.mxu0 0
    %199 = vmatpush1.bf16.msra.mxu0 %v168
    %200 = vmatprep.subr.bf16.mxu0 0
    %201 = vmatpush2.bf16.msra.mxu0 0
    %202 = vmatprep.subr.bf16.mxu0 0
    %203 = vmatpush2.bf16.msra.mxu0 0
    %204 = vmatprep.subr.bf16.mxu0 0
    %205 = vmatpush2.bf16.msra.mxu0 0
    %206 = vmatprep.subr.bf16.mxu0 0
    %207 = vmatpush2.bf16.msra.mxu0 0
    %208 = vmatprep.subr.bf16.mxu0 0
    %209 = vmatpush2.bf16.msra.mxu0 0
    %210 = vmatprep.subr.bf16.mxu0 0
    %211 = vmatpush2.bf16.msra.mxu0 0
    %212 = vmatprep.subr.bf16.mxu0 0
    %213 = vmatpush2.bf16.msra.mxu0 0
    %214 = vmatprep.subr.bf16.mxu0 0
    %215 = vmatpush2.bf16.msra.mxu0 0
    %216 = vmatprep.mubr.bf16.mxu0 0
    %217 = vmatmul.mubr.bf16.gmra.mxu0 %v134
    %v218 = vpop.f32.mrf.mxu0
    %v219 = vadd.f32 %v128, %v218
    %v220 = vpop.f32.mrf.mxu0
    %v221 = vpop.f32.mrf.mxu0
    %v222 = vadd.f32 %v128, %v221
    %v223 = vpop.f32.mrf.mxu0
    %224 = vdwg.mxu0
    %v225 = vpack.c.bf16 %v222, %v219
    %v226 = vld [vmem:[#allocation8] sm:$0xff]
    %v227 = vld [vmem:[#allocation8 + $0x8] sm:$0xff]
    %v228 = vld [vmem:[#allocation8 + $0x10] sm:$0xff]
    %v229 = vld [vmem:[#allocation8 + $0x18] sm:$0xff]
    %v230 = vld [vmem:[#allocation8 + $0x20] sm:$0xff]
    %v231 = vld [vmem:[#allocation8 + $0x28] sm:$0xff]
    %v232 = vld [vmem:[#allocation8 + $0x30] sm:$0xff]
    %v233 = vld [vmem:[#allocation8 + $0x38] sm:$0xff]
    %v234 = vld [vmem:[#allocation8 + $0x40] sm:$0xff]
    %v235 = vld [vmem:[#allocation8 + $0x48] sm:$0xff]
    %v236 = vld [vmem:[#allocation8 + $0x50] sm:$0xff]
    %v237 = vld [vmem:[#allocation8 + $0x58] sm:$0xff]
    %v238 = vld [vmem:[#allocation8 + $0x60] sm:$0xff]
    %v239 = vld [vmem:[#allocation8 + $0x68] sm:$0xff]
    %v240 = vld [vmem:[#allocation8 + $0x70] sm:$0xff]
    %v241 = vld [vmem:[#allocation8 + $0x78] sm:$0xff]
    %v242 = vld [vmem:[%s5] sm:$0x3]
    %v244 = vlaneseq
    %v245 = vshrl.u32 %v244, 7
    %v246 = vsub.s32 0, %v245
    %v247 = vrot.slane %v242, %v246
    %v248 = vlaneseq
    %v249 = vshrl.u32 %v248, 7
    %v250 = vsub.s32 1, %v249
    %v251 = vrot.slane %v242, %v250
    %v270 = vunpack.c.l.b16 %v226
    %v271 = vunpack.c.h.b16 %v226
    %v272 = vunpack.c.l.b16 %v227
    %v273 = vunpack.c.h.b16 %v227
    %v274 = vunpack.c.l.b16 %v228
    %v275 = vunpack.c.h.b16 %v228
    %v276 = vunpack.c.l.b16 %v229
    %v277 = vunpack.c.h.b16 %v229
    %v278 = vunpack.c.l.b16 %v230
    %v279 = vunpack.c.h.b16 %v230
    %v280 = vunpack.c.l.b16 %v231
    %v281 = vunpack.c.h.b16 %v231
    %v282 = vunpack.c.l.b16 %v232
    %v283 = vunpack.c.h.b16 %v232
    %v284 = vunpack.c.l.b16 %v233
    %v285 = vunpack.c.h.b16 %v233
    %v286 = vunpack.c.l.b16 %v234
    %v287 = vunpack.c.h.b16 %v234
    %v288 = vunpack.c.l.b16 %v235
    %v289 = vunpack.c.h.b16 %v235
    %v290 = vunpack.c.l.b16 %v236
    %v291 = vunpack.c.h.b16 %v236
    %v292 = vunpack.c.l.b16 %v237
    %v293 = vunpack.c.h.b16 %v237
    %v294 = vunpack.c.l.b16 %v238
    %v295 = vunpack.c.h.b16 %v238
    %v296 = vunpack.c.l.b16 %v239
    %v297 = vunpack.c.h.b16 %v239
    %v298 = vunpack.c.l.b16 %v240
    %v299 = vunpack.c.h.b16 %v240
    %v300 = vunpack.c.l.b16 %v241
    %v301 = vunpack.c.h.b16 %v241
    %v302 = vpack.c.b16 %v272, %v270
    %v303 = vpack.c.b16 %v273, %v271
    %v304 = vpack.c.b16 %v276, %v274
    %v305 = vpack.c.b16 %v277, %v275
    %v306 = vpack.c.b16 %v280, %v278
    %v307 = vpack.c.b16 %v281, %v279
    %v308 = vpack.c.b16 %v284, %v282
    %v309 = vpack.c.b16 %v285, %v283
    %v310 = vpack.c.b16 %v288, %v286
    %v311 = vpack.c.b16 %v289, %v287
    %v312 = vpack.c.b16 %v292, %v290
    %v313 = vpack.c.b16 %v293, %v291
    %v314 = vpack.c.b16 %v296, %v294
    %v315 = vpack.c.b16 %v297, %v295
    %v316 = vpack.c.b16 %v300, %v298
    %v317 = vpack.c.b16 %v301, %v299
    %334 = vmatprep.subr.bf16.mxu0 %v317
    %335 = vmatpush1.bf16.msra.mxu0 %v316
    %336 = vmatprep.subr.bf16.mxu0 %v315
    %337 = vmatpush1.bf16.msra.mxu0 %v314
    %338 = vmatprep.subr.bf16.mxu0 %v313
    %339 = vmatpush1.bf16.msra.mxu0 %v312
    %340 = vmatprep.subr.bf16.mxu0 %v311
    %341 = vmatpush1.bf16.msra.mxu0 %v310
    %342 = vmatprep.subr.bf16.mxu0 %v309
    %343 = vmatpush1.bf16.msra.mxu0 %v308
    %344 = vmatprep.subr.bf16.mxu0 %v307
    %345 = vmatpush1.bf16.msra.mxu0 %v306
    %346 = vmatprep.subr.bf16.mxu0 %v305
    %347 = vmatpush1.bf16.msra.mxu0 %v304
    %348 = vmatprep.subr.bf16.mxu0 %v303
    %349 = vmatpush1.bf16.msra.mxu0 %v302
    %350 = vmatprep.subr.bf16.mxu0 0
    %351 = vmatpush2.bf16.msra.mxu0 0
    %352 = vmatprep.subr.bf16.mxu0 0
    %353 = vmatpush2.bf16.msra.mxu0 0
    %354 = vmatprep.subr.bf16.mxu0 0
    %355 = vmatpush2.bf16.msra.mxu0 0
    %356 = vmatprep.subr.bf16.mxu0 0
    %357 = vmatpush2.bf16.msra.mxu0 0
    %358 = vmatprep.subr.bf16.mxu0 0
    %359 = vmatpush2.bf16.msra.mxu0 0
    %360 = vmatprep.subr.bf16.mxu0 0
    %361 = vmatpush2.bf16.msra.mxu0 0
    %362 = vmatprep.subr.bf16.mxu0 0
    %363 = vmatpush2.bf16.msra.mxu0 0
    %364 = vmatprep.subr.bf16.mxu0 0
    %365 = vmatpush2.bf16.msra.mxu0 0
    %366 = vmatprep.mubr.bf16.mxu0 0
    %367 = vmatmul.mubr.bf16.gmra.mxu0 %v225
    %v368 = vpop.f32.mrf.mxu0
    %v369 = vadd.f32 %v247, %v368
    %v370 = vpop.f32.mrf.mxu0
    %v371 = vadd.f32 %v251, %v370
    %v372 = vpop.f32.mrf.mxu0
    %v373 = vadd.f32 %v247, %v372
    %v374 = vpop.f32.mrf.mxu0
    %v375 = vadd.f32 %v251, %v374
    %376 = vdwg.mxu0
    %v377 = vmul.f32 %v371, 0.5
    %v378 = vmul.f32 %v375, 0.5
    %v379 = vmul.f32 %v377, 1.442695
    %v380 = vpow.pop %v379
    %v381 = vmul.f32 %v378, 1.442695
    %v382 = vpow.pop %v381
    %v383 = vld [vmem:[#allocation5] sm:$0xff]
    %v384 = vld [vmem:[#allocation5 + $0x8] sm:$0xff]
    %v385 = vmul.f32 %v383, %v380
    %v386 = vmul.f32 %v384, %v382
    %v387 = vadd.f32 %v385, %v369
    %v388 = vadd.f32 %v386, %v373
    %v389 = vpack.c.bf16 %v388, %v387
    %v390 = vld [vmem:[#allocation10] sm:$0xf]
    %v391 = vld [vmem:[#allocation10 + $0x4] sm:$0xf]
    %v392 = vld [vmem:[#allocation10 + $0x8] sm:$0xf]
    %v393 = vld [vmem:[#allocation10 + $0xc] sm:$0xf]
    %v394 = vld [vmem:[#allocation10 + $0x10] sm:$0xf]
    %v395 = vld [vmem:[#allocation10 + $0x14] sm:$0xf]
    %v396 = vld [vmem:[#allocation10 + $0x18] sm:$0xf]
    %v397 = vld [vmem:[#allocation10 + $0x1c] sm:$0xf]
    %v398 = vld [vmem:[#allocation10 + $0x20] sm:$0xf]
    %v399 = vld [vmem:[#allocation10 + $0x24] sm:$0xf]
    %v400 = vld [vmem:[#allocation10 + $0x28] sm:$0xf]
    %v401 = vld [vmem:[#allocation10 + $0x2c] sm:$0xf]
    %v402 = vld [vmem:[#allocation10 + $0x30] sm:$0xf]
    %v403 = vld [vmem:[#allocation10 + $0x34] sm:$0xf]
    %v404 = vld [vmem:[#allocation10 + $0x38] sm:$0xf]
    %v405 = vld [vmem:[#allocation10 + $0x3c] sm:$0xf]
    %v406 = vld [vmem:[%s7] sm:$0x1]
    %v408 = vlaneseq
    %v409 = vshrl.u32 %v408, 7
    %v410 = vsub.s32 0, %v409
    %v411 = vrot.slane %v406, %v410
    %v429 = vunpack.c.l.b16 %v390
    %v430 = vunpack.c.l.b16 %v391
    %v431 = vunpack.c.l.b16 %v392
    %v432 = vunpack.c.l.b16 %v393
    %v433 = vunpack.c.l.b16 %v394
    %v434 = vunpack.c.l.b16 %v395
    %v435 = vunpack.c.l.b16 %v396
    %v436 = vunpack.c.l.b16 %v397
    %v437 = vunpack.c.l.b16 %v398
    %v438 = vunpack.c.l.b16 %v399
    %v439 = vunpack.c.l.b16 %v400
    %v440 = vunpack.c.l.b16 %v401
    %v441 = vunpack.c.l.b16 %v402
    %v442 = vunpack.c.l.b16 %v403
    %v443 = vunpack.c.l.b16 %v404
    %v444 = vunpack.c.l.b16 %v405
    %v445 = vpack.c.b16 %v430, %v429
    %v446 = vpack.c.b16 %v432, %v431
    %v447 = vpack.c.b16 %v434, %v433
    %v448 = vpack.c.b16 %v436, %v435
    %v449 = vpack.c.b16 %v438, %v437
    %v450 = vpack.c.b16 %v440, %v439
    %v451 = vpack.c.b16 %v442, %v441
    %v452 = vpack.c.b16 %v444, %v443
    %461 = vmatprep.subr.bf16.mxu0 0
    %462 = vmatpush1.bf16.msra.mxu0 %v452
    %463 = vmatprep.subr.bf16.mxu0 0
    %464 = vmatpush1.bf16.msra.mxu0 %v451
    %465 = vmatprep.subr.bf16.mxu0 0
    %466 = vmatpush1.bf16.msra.mxu0 %v450
    %467 = vmatprep.subr.bf16.mxu0 0
    %468 = vmatpush1.bf16.msra.mxu0 %v449
    %469 = vmatprep.subr.bf16.mxu0 0
    %470 = vmatpush1.bf16.msra.mxu0 %v448
    %471 = vmatprep.subr.bf16.mxu0 0
    %472 = vmatpush1.bf16.msra.mxu0 %v447
    %473 = vmatprep.subr.bf16.mxu0 0
    %474 = vmatpush1.bf16.msra.mxu0 %v446
    %475 = vmatprep.subr.bf16.mxu0 0
    %476 = vmatpush1.bf16.msra.mxu0 %v445
    %477 = vmatprep.subr.bf16.mxu0 0
    %478 = vmatpush2.bf16.msra.mxu0 0
    %479 = vmatprep.subr.bf16.mxu0 0
    %480 = vmatpush2.bf16.msra.mxu0 0
    %481 = vmatprep.subr.bf16.mxu0 0
    %482 = vmatpush2.bf16.msra.mxu0 0
    %483 = vmatprep.subr.bf16.mxu0 0
    %484 = vmatpush2.bf16.msra.mxu0 0
    %485 = vmatprep.subr.bf16.mxu0 0
    %486 = vmatpush2.bf16.msra.mxu0 0
    %487 = vmatprep.subr.bf16.mxu0 0
    %488 = vmatpush2.bf16.msra.mxu0 0
    %489 = vmatprep.subr.bf16.mxu0 0
    %490 = vmatpush2.bf16.msra.mxu0 0
    %491 = vmatprep.subr.bf16.mxu0 0
    %492 = vmatpush2.bf16.msra.mxu0 0
    %493 = vmatprep.mubr.bf16.mxu0 0
    %494 = vmatmul.mubr.bf16.gmra.mxu0 %v389
    %v495 = vpop.f32.mrf.mxu0
    %v496 = vadd.f32 %v411, %v495
    %v497 = vpop.f32.mrf.mxu0
    %v498 = vpop.f32.mrf.mxu0
    %v499 = vadd.f32 %v411, %v498
    %v500 = vpop.f32.mrf.mxu0
    %501 = vdwg.mxu0
    %v502 = vxor.u32 %v496, 2147483648
    %v503 = vxor.u32 %v499, 2147483648
    %v504 = vmul.f32 %v502, 1.442695
    %v505 = vpow.pop %v504
    %v506 = vmul.f32 %v503, 1.442695
    %v507 = vpow.pop %v506
    %v508 = vadd.f32 %v505, 1.0
    %v509 = vadd.f32 %v507, 1.0
    %v510 = vrcp.pop %v508
    %v511 = vmul.f32 1.0, %v510
    %v512 = vrcp.pop %v509
    %v513 = vmul.f32 1.0, %v512
    %514 = vst [vmem:[#allocation11] sm:$0xff] %v369
    %515 = vst [vmem:[#allocation11 + $0x8] sm:$0xff] %v373
    %516 = vst [vmem:[#allocation12] sm:$0xff] %v371
    %517 = vst [vmem:[#allocation12 + $0x8] sm:$0xff] %v375
    %518 = vst [vmem:[#allocation14] sm:$0xff] %v387
    %519 = vst [vmem:[#allocation14 + $0x8] sm:$0xff] %v388
    %520 = vst [vmem:[#allocation15] sm:$0xff] %v511
    %521 = vst [vmem:[#allocation15 + $0x8] sm:$0xff] %v513
    // Predicated region
    $region54: #{tpu_custom_call.1} parent=1 // pred_check
      _
    $region55: #{tpu_custom_call.1} parent=1 // pred_check_branch
      %523 = sbr.rel (0) target = $region57
    $region56: #{tpu_custom_call.1} parent=1 // pred_region
      %s525 = ssub.s32 256, 256
      %526 = vsyncadd [#allocation4], %s525
      %s527 = sshll.u32 [#allocation11], 4
      %s528 = int_to_ptr.vmem [resolvable:$true] %s527
      %533 = dma.vmem_to_hbm [thread:$0]  %s528, 256, %s8, [#allocation4], 128, 128, 8
    $region57: #{tpu_custom_call.1} parent=1 // pred_fallthru
      _
    // Predicated region
    $region58: #{tpu_custom_call.1} parent=1 // pred_check
      _
    $region59: #{tpu_custom_call.1} parent=1 // pred_check_branch
      %535 = sbr.rel (0) target = $region61
    $region60: #{tpu_custom_call.1} parent=1 // pred_region
      %s537 = ssub.s32 256, 256
      %538 = vsyncadd [#allocation13], %s537
      %s539 = sshll.u32 [#allocation12], 4
      %s540 = int_to_ptr.vmem [resolvable:$true] %s539
      %545 = dma.vmem_to_hbm [thread:$0]  %s540, 256, %s9, [#allocation13], 128, 128, 8
    $region61: #{tpu_custom_call.1} parent=1 // pred_fallthru
      _
    // Predicated region
    $region62: #{tpu_custom_call.1} parent=1 // pred_check
      _
    $region63: #{tpu_custom_call.1} parent=1 // pred_check_branch
      %547 = sbr.rel (0) target = $region65
    $region64: #{tpu_custom_call.1} parent=1 // pred_region
      %s549 = ssub.s32 256, 256
      %550 = vsyncadd [#allocation13], %s549
      %s551 = sshll.u32 [#allocation14], 4
      %s552 = int_to_ptr.vmem [resolvable:$true] %s551
      %557 = dma.vmem_to_hbm [thread:$0]  %s552, 256, %s10, [#allocation13], 128, 128, 8
    $region65: #{tpu_custom_call.1} parent=1 // pred_fallthru
      _
    // Predicated region
    $region66: #{tpu_custom_call.1} parent=1 // pred_check
      _
    $region67: #{tpu_custom_call.1} parent=1 // pred_check_branch
      %559 = sbr.rel (0) target = $region69
    $region68: #{tpu_custom_call.1} parent=1 // pred_region
      %s561 = ssub.s32 256, 256
      %562 = vsyncadd [#allocation16], %s561
      %s563 = sshll.u32 [#allocation15], 4
      %s564 = int_to_ptr.vmem [resolvable:$true] %s563
      %569 = dma.vmem_to_hbm [thread:$0]  %s564, 256, %s11, [#allocation16], 128, 128, 8
    $region69: #{tpu_custom_call.1} parent=1 // pred_fallthru
      _
    // Predicated region
    $region70: #{tpu_custom_call.1} parent=1 // pred_check
      _
    $region71: #{tpu_custom_call.1} parent=1 // pred_check_branch
      %571 = sbr.rel (0) target = $region73
    $region72: #{tpu_custom_call.1} parent=1 // pred_region
      %572 = dma.done [#allocation4], 256
    $region73: #{tpu_custom_call.1} parent=1 // pred_fallthru
      _
    // Predicated region
    $region74: #{tpu_custom_call.1} parent=1 // pred_check
      _
    $region75: #{tpu_custom_call.1} parent=1 // pred_check_branch
      %574 = sbr.rel (0) target = $region77
    $region76: #{tpu_custom_call.1} parent=1 // pred_region
      %575 = dma.done [#allocation13], 256
    $region77: #{tpu_custom_call.1} parent=1 // pred_fallthru
      _
    // Predicated region
    $region78: #{tpu_custom_call.1} parent=1 // pred_check
      _
    $region79: #{tpu_custom_call.1} parent=1 // pred_check_branch
      %577 = sbr.rel (0) target = $region81
    $region80: #{tpu_custom_call.1} parent=1 // pred_region
      %578 = dma.done [#allocation13], 256
    $region81: #{tpu_custom_call.1} parent=1 // pred_fallthru
      _
    // Predicated region
    $region82: #{tpu_custom_call.1} parent=1 // pred_check
      _
    $region83: #{tpu_custom_call.1} parent=1 // pred_check_branch
      %580 = sbr.rel (0) target = $region85
    $region84: #{tpu_custom_call.1} parent=1 // pred_region
      %581 = dma.done [#allocation16], 256
    $region85: #{tpu_custom_call.1} parent=1 // pred_fallthru
      _
    %582 = vsyncpa [#allocation3], 1
    %583 = vsyncpa [#allocation6], 1
    %584 = vsyncpa [#allocation9], 1
    %585 = vsyncpa [#allocation4], 1
    %586 = vsyncpa [#allocation13], 1
    %587 = vsyncpa [#allocation16], 1

</llo_original>
